<compile_context>
chip_gen: v7x
topology: tpu7x:2x2x1
jax: 0.10.0
libtpu: 0.0.40
codegen_flags: <defaults>
</compile_context>

<pallas_src>
import functools

import jax
import jax.numpy as jnp
from jax import lax
from jax.experimental import pallas as pl
from jax.experimental.pallas import tpu as pltpu


def _round_up(x, m):
    return ((x + m - 1) // m) * m


def _vmem_budget():
    """Generation-aware VMEM budgeting (bytes).

    Returns (working_set_budget, vmem_limit_cap).  v5e/v6e have 128 MiB VMEM
    per TensorCore, v7x only 64 MiB; budget ~65% for tiles and cap
    vmem_limit_bytes at ~75%.  Falls back to the most conservative (v7x)
    numbers if the hardware query is unavailable.
    """
    try:
        cap = int(pltpu.get_tpu_info().vmem_capacity_bytes)
    except Exception:
        cap = 64 << 20
    return (cap * 13) // 20, (cap * 3) // 4


def _dot_nt(x, w):
    # x: (tm, tk), w: (classes_p, tk) -> (tm, classes_p).
    # NT contraction (feature dims of both operands) on the MXU, f32 acc.
    return lax.dot_general(
        x, w,
        dimension_numbers=(((1,), (1,)), ((), ())),
        preferred_element_type=jnp.float32,
    )


def _mask_k_tail(x, w, k, ft_in, tk):
    """Zero the out-of-bounds feature tail of both operands on a partial last
    K block (buffer contents past the array edge are unspecified)."""
    if ft_in % tk == 0:
        return x, w
    rem = ft_in - k * tk
    xcol = lax.broadcasted_iota(jnp.int32, x.shape, 1)
    wcol = lax.broadcasted_iota(jnp.int32, w.shape, 1)
    x = jnp.where(xcol < rem, x, jnp.zeros_like(x))
    w = jnp.where(wcol < rem, w, jnp.zeros_like(w))
    return x, w


def _kernel_single_k(x_ref, w_ref, b_ref, o_ref):
    # Whole feature dim in one step: no scratch, no epilogue.
    o_ref[...] = (_dot_nt(x_ref[...], w_ref[...]) + b_ref[...]).astype(o_ref.dtype)


def _kernel_multi_k_f32out(x_ref, w_ref, b_ref, o_ref, *, ft_in, tk):
    # f32 output block is VMEM-resident across the K axis (index_map ignores
    # k): accumulate straight into it. Init with the bias so there is no
    # finalize pass at all.
    k = pl.program_id(1)

    @pl.when(k == 0)
    def _init():
        o_ref[...] = jnp.broadcast_to(b_ref[...], o_ref.shape)

    x, w = _mask_k_tail(x_ref[...], w_ref[...], k, ft_in, tk)
    o_ref[...] += _dot_nt(x, w)


def _kernel_multi_k_acc(x_ref, w_ref, b_ref, o_ref, acc_ref, *, ft_in, tk):
    # Non-f32 output (e.g. bf16 activations): f32 scratch accumulator.
    k = pl.program_id(1)

    @pl.when(k == 0)
    def _init():
        acc_ref[...] = jnp.zeros_like(acc_ref)

    x, w = _mask_k_tail(x_ref[...], w_ref[...], k, ft_in, tk)
    acc_ref[...] += _dot_nt(x, w)

    @pl.when(k == pl.num_programs(1) - 1)
    def _finalize():
        o_ref[...] = (acc_ref[...] + b_ref[...]).astype(o_ref.dtype)


def _choose_tiles(n, ft_in, classes_p, x_bytes, w_bytes, o_bytes, f32_out,
                  budget_bytes, tm_max=2048):
    """Pick (tm, tk, multi_k).

    Prefer tk == ft_in (single K step: weight fetched from HBM exactly once,
    no accumulator); only split K when the double-buffered weight plus a
    reasonable (~256-row) tile genuinely cannot fit the VMEM budget.
    """
    min_rows = max(min(n, 256), 8)

    def working_set(tm, tk, multi_k):
        wb = 2 * classes_p * tk * w_bytes + 2 * classes_p * 4      # weight + bias
        xb = 2 * tm * tk * x_bytes                                  # x tiles
        ob = 2 * tm * classes_p * o_bytes                           # out tiles
        acc = tm * classes_p * 4 if (multi_k and not f32_out) else 0
        return wb + xb + ob + acc

    if working_set(min_rows, ft_in, False) <= budget_bytes:
        tk, multi_k = ft_in, False
    else:
        # Largest 128-multiple tk whose working set with a ~256-row tile fits.
        acc = min_rows * classes_p * 4 if not f32_out else 0
        fixed_non_k = 2 * classes_p * 4 + 2 * min_rows * classes_p * o_bytes + acc
        per_k_col = 2 * classes_p * w_bytes + 2 * min_rows * x_bytes
        tk = (budget_bytes - fixed_non_k) // max(per_k_col, 1)
        tk = max((tk // 128) * 128, 128)
        if tk >= ft_in:
            tk, multi_k = ft_in, False
        else:
            multi_k = True

    # Spend the rest of the budget on the row tile (the HBM-bound lever).
    acc_per_row = classes_p * 4 if (multi_k and not f32_out) else 0
    fixed = 2 * classes_p * tk * w_bytes + 2 * classes_p * 4
    per_row = 2 * tk * x_bytes + 2 * classes_p * o_bytes + acc_per_row
    tm = max((budget_bytes - fixed) // max(per_row, 1), 8)
    tm = int(min(tm, tm_max))
    if tm >= n:
        tm = n
        if n >= 256:
            # >=2 balanced row tiles so both of v7x's TensorCores get work.
            tm = _round_up(-(-n // 2), 8)
    elif tm >= 256:
        tm = (tm // 256) * 256
    else:
        tm = max((tm // 8) * 8, 8)
    return int(tm), int(tk), multi_k


@functools.partial(jax.jit, static_argnames=("use_pallas", "keep_padded_classes"))
def logreg_forward(seq, weight, bias, *, use_pallas=None, keep_padded_classes=False):
    """Pallas implementation of LogReg.forward: seq @ weight.T + bias.

    seq:    (n, ft_in)
    weight: (nb_classes, ft_in)  -- PyTorch nn.Linear layout, used as-is
    bias:   (nb_classes,)
    use_pallas: None = auto (tiny problems fall back to plain XLA dot).
    keep_padded_classes: return the lane-dense (n, round_up(nb_classes,128))
        output (padded class columns are exact zeros) and skip the post-kernel
        slice / extra HBM pass.
    """
    n, ft_in = seq.shape
    nb_classes, ft_in_w = weight.shape
    assert ft_in_w == ft_in and bias.shape == (nb_classes,)
    out_dtype = seq.dtype
    classes_p = _round_up(nb_classes, 128)

    if use_pallas is None:
        # Tiny problems: launch / pad / slice overhead dominates; XLA's fused
        # dot is strictly faster there.
        use_pallas = (n * ft_in >= (1 << 16)) or (n * classes_p >= (1 << 16))

    if not use_pallas:
        out = (jnp.dot(seq, weight.astype(seq.dtype).T,
                       preferred_element_type=jnp.float32)
               + bias.astype(jnp.float32)).astype(out_dtype)
        if keep_padded_classes and classes_p != nb_classes:
            out = jnp.pad(out, ((0, 0), (0, classes_p - nb_classes)))
        return out

    # Weight/bias are small and fetched once -> one-time casts/pads are cheap.
    # We deliberately do NOT cast `seq` (the HBM-bound operand): a wrapper-side
    # cast is a separate un-hidden XLA pass; keep activations bf16 end-to-end
    # upstream if you want the bf16 bandwidth win.
    if weight.dtype != seq.dtype:
        weight = weight.astype(seq.dtype)
    if classes_p != nb_classes:
        weight = jnp.pad(weight, ((0, classes_p - nb_classes), (0, 0)))
        bias = jnp.pad(bias, (0, classes_p - nb_classes))
    b2d = bias.reshape(1, classes_p).astype(jnp.float32)

    x_bytes = seq.dtype.itemsize
    w_bytes = weight.dtype.itemsize
    o_bytes = jnp.dtype(out_dtype).itemsize
    f32_out = jnp.dtype(out_dtype) == jnp.dtype(jnp.float32)

    budget, limit_cap = _vmem_budget()
    tm, tk, _ = _choose_tiles(n, ft_in, classes_p, x_bytes, w_bytes, o_bytes,
                              f32_out, budget)
    kt = pl.cdiv(ft_in, tk)
    nt = pl.cdiv(n, tm)

    if kt == 1:
        grid = (nt,)
        in_specs = [
            pl.BlockSpec((tm, ft_in), lambda i: (i, 0)),           # x row tile
            pl.BlockSpec((classes_p, ft_in), lambda i: (0, 0)),    # weight (grid-constant)
            pl.BlockSpec((1, classes_p), lambda i: (0, 0)),        # bias
        ]
        out_specs = pl.BlockSpec((tm, classes_p), lambda i: (i, 0))
        scratch = []
        kernel = _kernel_single_k
        dim_sems = ("parallel",)
        use_acc = False
    else:
        grid = (nt, kt)                                            # reduction axis last
        in_specs = [
            pl.BlockSpec((tm, tk), lambda i, k: (i, k)),
            pl.BlockSpec((classes_p, tk), lambda i, k: (0, k)),
            pl.BlockSpec((1, classes_p), lambda i, k: (0, 0)),
        ]
        out_specs = pl.BlockSpec((tm, classes_p), lambda i, k: (i, 0))
        if f32_out:
            kernel = functools.partial(_kernel_multi_k_f32out, ft_in=ft_in, tk=tk)
            scratch = []
            use_acc = False
        else:
            kernel = functools.partial(_kernel_multi_k_acc, ft_in=ft_in, tk=tk)
            scratch = [pltpu.VMEM((tm, classes_p), jnp.float32)]
            use_acc = True
        dim_sems = ("parallel", "arbitrary")

    # Actual pipelined allocation (inputs/outputs double-buffered by default).
    vmem_need = (2 * tm * tk * x_bytes
                 + 2 * classes_p * tk * w_bytes
                 + 2 * classes_p * 4
                 + 2 * tm * classes_p * o_bytes
                 + (tm * classes_p * 4 if use_acc else 0))
    vmem_limit = int(min(max(vmem_need * 3 // 2, 16 << 20) + (2 << 20), limit_cap))
    vmem_limit = int(max(vmem_limit, vmem_need + (1 << 20)))

    out_padded = pl.pallas_call(
        kernel,
        out_shape=jax.ShapeDtypeStruct((n, classes_p), out_dtype),
        grid_spec=pltpu.PrefetchScalarGridSpec(
            num_scalar_prefetch=0,
            grid=grid,
            in_specs=in_specs,
            out_specs=out_specs,
            scratch_shapes=scratch,
        ),
        compiler_params=pltpu.CompilerParams(
            dimension_semantics=dim_sems,
            vmem_limit_bytes=vmem_limit,
        ),
    )(seq, weight, b2d)

    if keep_padded_classes or classes_p == nb_classes:
        return out_padded
    return out_padded[:, :nb_classes]


def init_logreg_params(key, ft_in, nb_classes, dtype=jnp.float32):
    """xavier_uniform_ weight init + zero bias (matches the PyTorch module)."""
    limit = (6.0 / (ft_in + nb_classes)) ** 0.5
    w = jax.random.uniform(
        key, (nb_classes, ft_in), dtype=dtype, minval=-limit, maxval=limit
    )
    b = jnp.zeros((nb_classes,), dtype=dtype)
    return w, b


if __name__ == "__main__":
    key = jax.random.PRNGKey(0)
    k_x, k_w = jax.random.split(key)

    batch = 16       # number of node/sample rows
    ft_in = 32       # input feature dim
    nb_classes = 8   # output classes

    x = jax.random.normal(k_x, (batch, ft_in), dtype=jnp.float32)
    w, b = init_logreg_params(k_w, ft_in, nb_classes)

    # Force the Pallas path (the auto heuristic would route this demo-sized
    # problem to the plain-XLA fast path).
    out = logreg_forward(x, w, b, use_pallas=True)
    jax.block_until_ready(out)

    # sanity check against plain JAX reference
    ref = x @ w.T + b
    assert out.shape == (batch, nb_classes)
    assert jnp.allclose(out, ref, atol=1e-5, rtol=1e-5)

    print("KERNEL_OK")
</pallas_src>

<mosaic_0001>
module attributes {stable_mosaic.version = 11 : i64} {
  func.func @_kernel_single_k(%arg0: i32, %arg1: memref<16x32xf32, #tpu.memory_space<vmem>>, %arg2: memref<128x32xf32, #tpu.memory_space<vmem>>, %arg3: memref<1x128xf32, #tpu.memory_space<vmem>>, %arg4: memref<16x128xf32, #tpu.memory_space<vmem>>) attributes {dimension_semantics = [#tpu.dimension_semantics<parallel>], iteration_bounds = array<i64: 1>, scalar_prefetch = 0 : i64, scratch_operands = 0 : i64, tpu.core_type = #tpu.core_type<tc>, window_params = [{transform_indices = @transform_0, window_bounds = array<i64: 16, 32>}, {pipeline_mode = #tpu.pipeline_mode<synchronous>, transform_indices = @transform_1, window_bounds = array<i64: 128, 32>}, {pipeline_mode = #tpu.pipeline_mode<synchronous>, transform_indices = @transform_2, window_bounds = array<i64: 1, 128>}, {transform_indices = @transform_3, window_bounds = array<i64: 16, 128>}]} {
    %c0 = arith.constant 0 : index
    %c0_0 = arith.constant 0 : index
    %0 = vector.load %arg1[%c0, %c0_0] : memref<16x32xf32, #tpu.memory_space<vmem>>, vector<16x32xf32>
    %c0_1 = arith.constant 0 : index
    %c0_2 = arith.constant 0 : index
    %1 = vector.load %arg2[%c0_1, %c0_2] : memref<128x32xf32, #tpu.memory_space<vmem>>, vector<128x32xf32>
    %cst = arith.constant dense<0.000000e+00> : vector<16x128xf32>
    %2 = tpu.matmul %0, %1, %cst {dimension_numbers = #tpu.dot_dimension_numbers<[1], [1], [0], [0], [0, 0, 1, 0], [], []>} : vector<16x32xf32>, vector<128x32xf32>, vector<16x128xf32> -> vector<16x128xf32>
    %c0_3 = arith.constant 0 : index
    %c0_4 = arith.constant 0 : index
    %3 = vector.load %arg3[%c0_3, %c0_4] : memref<1x128xf32, #tpu.memory_space<vmem>>, vector<1x128xf32>
    %4 = vector.broadcast %3 : vector<1x128xf32> to vector<16x128xf32>
    %5 = arith.addf %2, %4 : vector<16x128xf32>
    %c0_5 = arith.constant 0 : index
    %c0_6 = arith.constant 0 : index
    %6 = vector.load %arg4[%c0_5, %c0_6] : memref<16x128xf32, #tpu.memory_space<vmem>>, vector<16x128xf32>
    tpu.vector_store %arg4[%c0_5, %c0_6], %5 {strides = array<i32>} : memref<16x128xf32, #tpu.memory_space<vmem>>, vector<16x128xf32>,
    return
  }
  func.func @transform_0(%arg0: i32) -> (i32, i32) {
    %c0_i32 = arith.constant 0 : i32
    %c0_i32_0 = arith.constant 0 : i32
    return %arg0, %c0_i32 : i32, i32
  }
  func.func @transform_1(%arg0: i32) -> (i32, i32) {
    %c0_i32 = arith.constant 0 : i32
    %c0_i32_0 = arith.constant 0 : i32
    %c0_i32_1 = arith.constant 0 : i32
    return %c0_i32, %c0_i32_0 : i32, i32
  }
  func.func @transform_2(%arg0: i32) -> (i32, i32) {
    %c0_i32 = arith.constant 0 : i32
    %c0_i32_0 = arith.constant 0 : i32
    %c0_i32_1 = arith.constant 0 : i32
    return %c0_i32, %c0_i32_0 : i32, i32
  }
  func.func @transform_3(%arg0: i32) -> (i32, i32) {
    %c0_i32 = arith.constant 0 : i32
    %c0_i32_0 = arith.constant 0 : i32
    return %arg0, %c0_i32 : i32, i32
  }
}

</mosaic_0001>

<llo_original>
// kernel: logreg_forward.1
$region0: #{logreg_forward.1}
  #allocation0 [shape = 'u32[]', space=smem, size = 0x4, offset = 0x4, fixed_abs, tag = 'smem constant byte address 0x4 - core index']
  #allocation1 [shape = 'u32[144,128]{1,0:T(1,128)}', space=vmem, size = 0x12000, scoped, tag = 'internal scratch']
  %s0 = inlined_call_operand.vmem [shape: f32[16,32], index: 0, kind: input, shape index: {}]
  %s1 = inlined_call_operand.vmem [shape: f32[128,32], index: 1, kind: input, shape index: {}]
  %s2 = inlined_call_operand.vmem [shape: f32[1,128], index: 2, kind: input, shape index: {}]
  %s3 = inlined_call_operand.vmem [shape: f32[16,128], index: 3, kind: output, shape index: {}]
  %s4 = sld [smem:[#allocation0]]
  $region22: #{logreg_forward.1} parent=0
    _
  %s6 = ssub.s32 1, %s4
  %s7 = scalar_select 0, %s6, %s4
  // Predicated region
  $region2: #{logreg_forward.1} parent=0 // pred_check
    _
  $region3: #{logreg_forward.1} parent=0 // pred_check_branch
    %9 = sbr.rel (0) target = $region5
  $region4: #{logreg_forward.1} parent=0 // pred_region
    _
  $region5: #{logreg_forward.1} parent=0 // pred_fallthru
    _
  // Predicated region
  $region6: #{logreg_forward.1} parent=0 // pred_check
    _
  $region7: #{logreg_forward.1} parent=0 // pred_check_branch
    %11 = sbr.rel (0) target = $region9
  $region8: #{logreg_forward.1} parent=0 // pred_region
    _
  $region9: #{logreg_forward.1} parent=0 // pred_fallthru
    _
  // Predicated region
  $region10: #{logreg_forward.1} parent=0 // pred_check
    _
  $region11: #{logreg_forward.1} parent=0 // pred_check_branch
    %13 = sbr.rel (0) target = $region13
  $region12: #{logreg_forward.1} parent=0 // pred_region
    _
  $region13: #{logreg_forward.1} parent=0 // pred_fallthru
    _
  %v14 = vld [vmem:[%s0] sm:$0xff]
  %v15 = vld [vmem:[%s0 + $0x8] sm:$0xff]
  %v16 = vld [vmem:[%s1] sm:$0xff]
  %v17 = vld [vmem:[%s1 + $0x8] sm:$0xff]
  %v18 = vld [vmem:[%s1 + $0x10] sm:$0xff]
  %v19 = vld [vmem:[%s1 + $0x18] sm:$0xff]
  %v20 = vld [vmem:[%s1 + $0x20] sm:$0xff]
  %v21 = vld [vmem:[%s1 + $0x28] sm:$0xff]
  %v22 = vld [vmem:[%s1 + $0x30] sm:$0xff]
  %v23 = vld [vmem:[%s1 + $0x38] sm:$0xff]
  %v24 = vld [vmem:[%s1 + $0x40] sm:$0xff]
  %v25 = vld [vmem:[%s1 + $0x48] sm:$0xff]
  %v26 = vld [vmem:[%s1 + $0x50] sm:$0xff]
  %v27 = vld [vmem:[%s1 + $0x58] sm:$0xff]
  %v28 = vld [vmem:[%s1 + $0x60] sm:$0xff]
  %v29 = vld [vmem:[%s1 + $0x68] sm:$0xff]
  %v30 = vld [vmem:[%s1 + $0x70] sm:$0xff]
  %v31 = vld [vmem:[%s1 + $0x78] sm:$0xff]
  %v32 = vld [vmem:[%s2] sm:$0x1]
  %v34 = vlaneseq
  %v35 = vshrl.u32 %v34, 7
  %v36 = vsub.s32 0, %v35
  %v37 = vrot.slane %v32, %v36
  %vm39 = vcmask 261120
  %v41 = vsel %vm39, %v14, 0
  %v44 = vsel %vm39, %v15, 0
  %v47 = vsel %vm39, %v16, 0
  %v50 = vsel %vm39, %v17, 0
  %v53 = vsel %vm39, %v18, 0
  %v56 = vsel %vm39, %v19, 0
  %v59 = vsel %vm39, %v20, 0
  %v62 = vsel %vm39, %v21, 0
  %v65 = vsel %vm39, %v22, 0
  %v68 = vsel %vm39, %v23, 0
  %v71 = vsel %vm39, %v24, 0
  %v74 = vsel %vm39, %v25, 0
  %v77 = vsel %vm39, %v26, 0
  %v80 = vsel %vm39, %v27, 0
  %v83 = vsel %vm39, %v28, 0
  %v86 = vsel %vm39, %v29, 0
  %v89 = vsel %vm39, %v30, 0
  %v92 = vsel %vm39, %v31, 0
  %94 = vmatprep.subr.mxu0 0.0
  %95 = vmatpush1.xpose.msra.mxu0 %v47
  %96 = vmatprep.subr.mxu0 0.0
  %97 = vmatpush1.xpose.msra.mxu0 %v50
  %98 = vmatprep.subr.mxu0 0.0
  %99 = vmatpush1.xpose.msra.mxu0 %v53
  %100 = vmatprep.subr.mxu0 0.0
  %101 = vmatpush1.xpose.msra.mxu0 %v56
  %102 = vmatprep.subr.mxu0 0.0
  %103 = vmatpush1.xpose.msra.mxu0 %v59
  %104 = vmatprep.subr.mxu0 0.0
  %105 = vmatpush1.xpose.msra.mxu0 %v62
  %106 = vmatprep.subr.mxu0 0.0
  %107 = vmatpush1.xpose.msra.mxu0 %v65
  %108 = vmatprep.subr.mxu0 0.0
  %109 = vmatpush1.xpose.msra.mxu0 %v68
  %110 = vmatprep.subr.mxu0 0.0
  %111 = vmatpush1.xpose.msra.mxu0 %v71
  %112 = vmatprep.subr.mxu0 0.0
  %113 = vmatpush1.xpose.msra.mxu0 %v74
  %114 = vmatprep.subr.mxu0 0.0
  %115 = vmatpush1.xpose.msra.mxu0 %v77
  %116 = vmatprep.subr.mxu0 0.0
  %117 = vmatpush1.xpose.msra.mxu0 %v80
  %118 = vmatprep.subr.mxu0 0.0
  %119 = vmatpush1.xpose.msra.mxu0 %v83
  %120 = vmatprep.subr.mxu0 0.0
  %121 = vmatpush1.xpose.msra.mxu0 %v86
  %122 = vmatprep.subr.mxu0 0.0
  %123 = vmatpush1.xpose.msra.mxu0 %v89
  %124 = vmatprep.subr.mxu0 0.0
  %125 = vmatpush1.xpose.msra.mxu0 %v92
  %126 = vmatprep.subr.mxu0 0.0
  %127 = vmatpush1.xpose.msra.mxu0 0.0
  %128 = vmatprep.subr.mxu0 0.0
  %129 = vmatpush1.xpose.msra.mxu0 0.0
  %130 = vmatprep.subr.mxu0 0.0
  %131 = vmatpush1.xpose.msra.mxu0 0.0
  %132 = vmatprep.subr.mxu0 0.0
  %133 = vmatpush1.xpose.msra.mxu0 0.0
  %134 = vmatprep.subr.mxu0 0.0
  %135 = vmatpush1.xpose.msra.mxu0 0.0
  %136 = vmatprep.subr.mxu0 0.0
  %137 = vmatpush1.xpose.msra.mxu0 0.0
  %138 = vmatprep.subr.mxu0 0.0
  %139 = vmatpush1.xpose.msra.mxu0 0.0
  %140 = vmatprep.subr.mxu0 0.0
  %141 = vmatpush1.xpose.msra.mxu0 0.0
  %142 = vmatprep.subr.mxu0 0.0
  %143 = vmatpush1.xpose.msra.mxu0 0.0
  %144 = vmatprep.subr.mxu0 0.0
  %145 = vmatpush1.xpose.msra.mxu0 0.0
  %146 = vmatprep.subr.mxu0 0.0
  %147 = vmatpush1.xpose.msra.mxu0 0.0
  %148 = vmatprep.subr.mxu0 0.0
  %149 = vmatpush1.xpose.msra.mxu0 0.0
  %150 = vmatprep.subr.mxu0 0.0
  %151 = vmatpush1.xpose.msra.mxu0 0.0
  %152 = vmatprep.subr.mxu0 0.0
  %153 = vmatpush1.xpose.msra.mxu0 0.0
  %154 = vmatprep.subr.mxu0 0.0
  %155 = vmatpush1.xpose.msra.mxu0 0.0
  %156 = vmatprep.subr.mxu0 0.0
  %157 = vmatpush1.xpose.msra.mxu0 0.0
  %158 = vmatprep.mubr.f32.mxu0 0.0
  %159 = vmatmul.mubr.f32.gmra.mrb[0].mxu0 %v41
  %v160 = vpop.f32.mrb[0].mxu0
  %v161 = vadd.f32 %v37, %v160
  %v162 = vpop.f32.mrb[0].mxu0
  %163 = vmatprep.mubr.f32.mxu0 0.0
  %164 = vmatmul.mubr.f32.gmra.mrb[0].mxu0 %v44
  %v165 = vpop.f32.mrb[0].mxu0
  %v166 = vadd.f32 %v37, %v165
  %v167 = vpop.f32.mrb[0].mxu0
  %168 = vdwg.mxu0
  %169 = vst [vmem:[%s3] sm:$0xff] %v161
  %170 = vst [vmem:[%s3 + $0x8] sm:$0xff] %v166
  // Predicated region
  $region14: #{logreg_forward.1} parent=0 // pred_check
    _
  $region15: #{logreg_forward.1} parent=0 // pred_check_branch
    %172 = sbr.rel (0) target = $region17
  $region16: #{logreg_forward.1} parent=0 // pred_region
    _
  $region17: #{logreg_forward.1} parent=0 // pred_fallthru
    _
  // Predicated region
  $region18: #{logreg_forward.1} parent=0 // pred_check
    _
  $region19: #{logreg_forward.1} parent=0 // pred_check_branch
    %174 = sbr.rel (0) target = $region21
  $region20: #{logreg_forward.1} parent=0 // pred_region
    _
  $region21: #{logreg_forward.1} parent=0 // pred_fallthru
    _

</llo_original>
